<compile_context>
chip_gen: v6e
topology: v6e:2x2x1
jax: 0.10.0
libtpu: 0.0.40
codegen_flags: <defaults>
</compile_context>

<pallas_src>
import math

import jax
import jax.numpy as jnp
from jax.experimental import pallas as pl
from jax.experimental.pallas import tpu as pltpu


def _activation(h, kind):
    if kind == "relu":
        return jnp.maximum(h, 0.0)
    if kind == "sigmoid":
        return jax.nn.sigmoid(h)
    if kind == "gelu":
        return jax.nn.gelu(h)
    if kind == "attention":
        # NOTE: softmax over the true H; never lane-pad H with zeros here
        # (would change the denominator).
        return jax.nn.softmax(h, axis=-1)
    return h  # identity


def _make_kernel(scale, activation, compute_dtype):
    def kernel(x_ref, w1_ref, w2_ref, o_ref):
        # x_ref : (tm, D_in)  input dtype (f32 or bf16)
        # w1_ref: (D_in, H)   compute_dtype (bf16), resident across grid
        # w2_ref: (H, D_out)  compute_dtype (bf16), resident across grid
        x = x_ref[...]
        # bf16 operands, f32 accumulation on the MXU
        h = jnp.dot(x.astype(compute_dtype), w1_ref[...],
                    preferred_element_type=jnp.float32)
        h = _activation(h, activation)                      # f32 epilogue (VPU)
        y = jnp.dot(h.astype(compute_dtype), w2_ref[...],
                    preferred_element_type=jnp.float32)
        if scale != 1.0:                                     # baked constant
            y = y * jnp.float32(scale)
        # Residual add in f32 from the un-cast x tile.
        o_ref[...] = (y + x.astype(jnp.float32)).astype(o_ref.dtype)
    return kernel


def _vmem_capacity_bytes():
    """Generation-aware VMEM capacity (64 MiB/TC on v7x, 128 MiB on v5e/v6e)."""
    try:
        cap = int(getattr(pltpu.get_tpu_info(), "vmem_capacity_bytes", 0))
        if cap > 0:
            return cap
    except Exception:
        pass
    return 64 * 1024 * 1024  # conservative default (v7x per-TensorCore VMEM)


def _choose_row_tile_cap(D_in, D_out, H, in_b, w_b, out_b,
                         vmem_budget_bytes, tm_hard_cap):
    """Largest row tile whose double-buffered footprint fits the budget."""
    # Resident weights, charged double-buffered (default pipeline mode).
    weight_bytes = 2 * (D_in * H + H * D_out) * w_b
    avail = max(vmem_budget_bytes - weight_bytes, 8 * D_in * in_b)
    # Per row: double-buffered x and out tiles + f32/bf16 intermediates.
    per_row = 2 * (D_in * in_b + D_out * out_b) + 4 * (H + D_out + D_in)
    tm = int(avail // per_row)
    tm = max(8, min(tm, tm_hard_cap))
    return (tm // 8) * 8                 # sublane alignment only (mem-bound)


def _pick_tile(M, tm_max):
    """Pick (tm, M_pad). Prefers a single step for small M, otherwise an
    8-aligned divisor of M (no padding) with an even step count (v7x 2 TCs)."""
    if M <= tm_max:
        # One grid step over the whole array: block_shape equals the full dim,
        # so the (8,128) constraint is satisfied, nothing is padded, and the
        # resident weights are DMA'd exactly once.
        return M, M
    limit = min(tm_max, M)
    divisors = [c for c in range(8, limit + 1, 8) if M % c == 0]
    if divisors:
        best = max(divisors)
        even = [c for c in divisors if (M // c) % 2 == 0]
        if even and 2 * max(even) >= best:
            best = max(even)          # balanced split across v7x's 2 cores
        return best, M
    # Fallback: minimal zero-padding (only when M has no 8-aligned divisor
    # <= tm_max). Padded rows are sliced off after the call.
    tm = max(8, (tm_max // 8) * 8)
    return tm, pl.cdiv(M, tm) * tm


def prepare_weights(w1, w2, compute_dtype=jnp.bfloat16):
    """Cast weights once at load time so the hot path avoids per-call casts."""
    return w1.astype(compute_dtype), w2.astype(compute_dtype)


def prompt_mlp(x, w1, w2, scale=1.0, *, activation="relu",
               compute_dtype=jnp.bfloat16, tm=None):
    """x: [B, N, D_in]; w1: [D_in, H]; w2: [H, D_out] (pre-transposed).

    Output dtype follows x.dtype; pass bf16 x to halve input/output HBM
    traffic (accumulation and the residual add stay in f32 inside the kernel).
    """
    B, N, D_in = x.shape
    H = w1.shape[1]
    D_out = w2.shape[1]
    assert w1.shape == (D_in, H) and w2.shape == (H, D_out)
    assert D_out == D_in, "residual add requires out_features == in_features"

    M = B * N
    x2d = x.reshape(M, D_in)

    # Cast only if the caller did not pre-cast with prepare_weights().
    w1c = w1 if w1.dtype == compute_dtype else w1.astype(compute_dtype)
    w2c = w2 if w2.dtype == compute_dtype else w2.astype(compute_dtype)

    in_b = jnp.dtype(x.dtype).itemsize
    w_b = jnp.dtype(compute_dtype).itemsize
    out_b = in_b

    cap = _vmem_capacity_bytes()
    vmem_budget = cap // 2                                   # tile-sizing budget
    tm_hard_cap = 2048 if cap <= 80 * 1024 * 1024 else 4096  # v7x vs v5e/v6e
    vmem_limit = min(int(cap * 0.75), 96 * 1024 * 1024)

    if tm is None:
        tm_max = _choose_row_tile_cap(D_in, D_out, H, in_b, w_b, out_b,
                                      vmem_budget, tm_hard_cap)
    else:
        tm_max = int(tm)
    tm, M_pad = _pick_tile(M, tm_max)

    if M_pad != M:
        x2d = jnp.pad(x2d, ((0, M_pad - M), (0, 0)))

    grid = (M_pad // tm,)
    kernel = _make_kernel(float(scale), activation, compute_dtype)

    # NOTE: output could be aliased onto x2d via input_output_aliases={0: 0}
    # (each tile reads its x block before writing the same block), but that
    # would make the op in-place w.r.t. the caller's x, so it is left off.
    out2d = pl.pallas_call(
        kernel,
        out_shape=jax.ShapeDtypeStruct((M_pad, D_out), x.dtype),
        grid_spec=pltpu.PrefetchScalarGridSpec(
            num_scalar_prefetch=0,
            grid=grid,
            in_specs=[
                pl.BlockSpec((tm, D_in), lambda i: (i, 0)),     # row tile of x
                pl.BlockSpec((D_in, H), lambda i: (0, 0)),      # resident W1
                pl.BlockSpec((H, D_out), lambda i: (0, 0)),     # resident W2
            ],
            out_specs=pl.BlockSpec((tm, D_out), lambda i: (i, 0)),
        ),
        compiler_params=pltpu.CompilerParams(
            dimension_semantics=("parallel",),
            vmem_limit_bytes=vmem_limit,
        ),
    )(x2d, w1c, w2c)

    if M_pad != M:
        out2d = out2d[:M]
    return out2d.reshape(B, N, D_out)


def init_params(key, in_features, hidden_features, out_features,
                dtype=jnp.float32):
    """Mimics torch.nn.Linear default init, stored pre-transposed as [in, out]."""
    k1, k2 = jax.random.split(key)
    bound1 = 1.0 / math.sqrt(in_features)
    bound2 = 1.0 / math.sqrt(hidden_features)
    w1 = jax.random.uniform(k1, (in_features, hidden_features),
                            minval=-bound1, maxval=bound1, dtype=dtype)
    w2 = jax.random.uniform(k2, (hidden_features, out_features),
                            minval=-bound2, maxval=bound2, dtype=dtype)
    return w1, w2


if __name__ == "__main__":
    key = jax.random.PRNGKey(0)
    kx, kp = jax.random.split(key)

    batch, seq = 2, 8
    in_features = 128          # == out_features (residual); lane-dense output
    hidden_features = 16       # PromptMLP default
    out_features = 128
    scale = 1.0                # learnable_scale=False default

    x = jax.random.normal(kx, (batch, seq, in_features), dtype=jnp.float32)
    w1, w2 = init_params(kp, in_features, hidden_features, out_features)
    # Cast weights once, outside the hot path.
    w1c, w2c = prepare_weights(w1, w2)

    out = jax.block_until_ready(prompt_mlp(x, w1c, w2c, scale))

    # Pure-JAX f32 reference; kernel uses bf16 MXU operands with f32
    # accumulation, so compare with a bf16-appropriate tolerance.
    ref = jnp.maximum(x @ w1, 0.0) @ w2 * scale + x
    assert out.shape == (batch, seq, out_features)
    max_err = float(jnp.max(jnp.abs(out - ref)))
    assert jnp.allclose(out, ref, atol=3e-2, rtol=3e-2), max_err

    print("KERNEL_OK")
</pallas_src>

<mosaic_0001>
module attributes {stable_mosaic.version = 11 : i64} {
  func.func @kernel(%arg0: i32, %arg1: memref<16x128xf32, #tpu.memory_space<vmem>>, %arg2: memref<128x16xbf16, #tpu.memory_space<vmem>>, %arg3: memref<16x128xbf16, #tpu.memory_space<vmem>>, %arg4: memref<16x128xf32, #tpu.memory_space<vmem>>) attributes {dimension_semantics = [#tpu.dimension_semantics<parallel>], iteration_bounds = array<i64: 1>, scalar_prefetch = 0 : i64, scratch_operands = 0 : i64, tpu.core_type = #tpu.core_type<tc>, window_params = [{transform_indices = @transform_0, window_bounds = array<i64: 16, 128>}, {pipeline_mode = #tpu.pipeline_mode<synchronous>, transform_indices = @transform_1, window_bounds = array<i64: 128, 16>}, {pipeline_mode = #tpu.pipeline_mode<synchronous>, transform_indices = @transform_2, window_bounds = array<i64: 16, 128>}, {transform_indices = @transform_3, window_bounds = array<i64: 16, 128>}]} {
    %c0 = arith.constant 0 : index
    %c0_0 = arith.constant 0 : index
    %0 = vector.load %arg1[%c0, %c0_0] : memref<16x128xf32, #tpu.memory_space<vmem>>, vector<16x128xf32>
    %1 = arith.truncf %0 : vector<16x128xf32> to vector<16x128xbf16>
    %c0_1 = arith.constant 0 : index
    %c0_2 = arith.constant 0 : index
    %2 = vector.load %arg2[%c0_1, %c0_2] : memref<128x16xbf16, #tpu.memory_space<vmem>>, vector<128x16xbf16>
    %cst = arith.constant dense<0.000000e+00> : vector<16x16xf32>
    %3 = tpu.matmul %1, %2, %cst {dimension_numbers = #tpu.dot_dimension_numbers<[1], [0], [0], [1], [0, 0, 1, 1], [], []>} : vector<16x128xbf16>, vector<128x16xbf16>, vector<16x16xf32> -> vector<16x16xf32>
    %cst_3 = arith.constant 0.000000e+00 : f32
    %4 = vector.broadcast %cst_3 : f32 to vector<16x16xf32>
    %5 = arith.maximumf %3, %4 : vector<16x16xf32>
    %6 = arith.truncf %5 : vector<16x16xf32> to vector<16x16xbf16>
    %c0_4 = arith.constant 0 : index
    %c0_5 = arith.constant 0 : index
    %7 = vector.load %arg3[%c0_4, %c0_5] : memref<16x128xbf16, #tpu.memory_space<vmem>>, vector<16x128xbf16>
    %cst_6 = arith.constant dense<0.000000e+00> : vector<16x128xf32>
    %8 = tpu.matmul %6, %7, %cst_6 {dimension_numbers = #tpu.dot_dimension_numbers<[1], [0], [0], [1], [0, 0, 1, 1], [], []>} : vector<16x16xbf16>, vector<16x128xbf16>, vector<16x128xf32> -> vector<16x128xf32>
    %9 = arith.addf %8, %0 : vector<16x128xf32>
    %c0_7 = arith.constant 0 : index
    %c0_8 = arith.constant 0 : index
    %10 = vector.load %arg4[%c0_7, %c0_8] : memref<16x128xf32, #tpu.memory_space<vmem>>, vector<16x128xf32>
    tpu.vector_store %arg4[%c0_7, %c0_8], %9 {strides = array<i32>} : memref<16x128xf32, #tpu.memory_space<vmem>>, vector<16x128xf32>,
    return
  }
  func.func @transform_0(%arg0: i32) -> (i32, i32) {
    %c0_i32 = arith.constant 0 : i32
    %c0_i32_0 = arith.constant 0 : i32
    return %arg0, %c0_i32 : i32, i32
  }
  func.func @transform_1(%arg0: i32) -> (i32, i32) {
    %c0_i32 = arith.constant 0 : i32
    %c0_i32_0 = arith.constant 0 : i32
    %c0_i32_1 = arith.constant 0 : i32
    return %c0_i32, %c0_i32_0 : i32, i32
  }
  func.func @transform_2(%arg0: i32) -> (i32, i32) {
    %c0_i32 = arith.constant 0 : i32
    %c0_i32_0 = arith.constant 0 : i32
    %c0_i32_1 = arith.constant 0 : i32
    return %c0_i32, %c0_i32_0 : i32, i32
  }
  func.func @transform_3(%arg0: i32) -> (i32, i32) {
    %c0_i32 = arith.constant 0 : i32
    %c0_i32_0 = arith.constant 0 : i32
    return %arg0, %c0_i32 : i32, i32
  }
}

</mosaic_0001>

<llo_original>
// kernel: tpu_custom_call.1
$region0: #{tpu_custom_call.1}
  #allocation0 [shape = 'u32[]', space=smem, size = 0x4, offset = 0x4, fixed_abs, tag = 'smem constant byte address 0x4 - core index']
  #allocation1 [shape = 'u32[144,128]{1,0:T(1,128)}', space=vmem, size = 0x12000, scoped, tag = 'internal scratch']
  %s0 = inlined_call_operand.vmem [shape: f32[16,128], index: 0, kind: input, shape index: {}]
  %s1 = inlined_call_operand.vmem [shape: bf16[128,16], index: 1, kind: input, shape index: {}]
  %s2 = inlined_call_operand.vmem [shape: bf16[16,128], index: 2, kind: input, shape index: {}]
  %s3 = inlined_call_operand.hbm [shape: f32[16,128], index: 3, kind: output, shape index: {}]
  %s4 = sld [smem:[#allocation0]]
  $region22: #{tpu_custom_call.1} parent=0
    _
  %s6 = ssub.s32 1, %s4
  %s7 = scalar_select 0, %s6, %s4
  $region1: #{tpu_custom_call.1} parent=0
    #allocation2 [shape = 'u8[8192]{0}', space=vmem, size = 0x2000, scoped, tag = 'output window, operand 0, single buffered']
    #allocation3 [shape = 's32[1]{0}', space=sflag, size = 0x4, scoped, tag = 'scoped memory for tpu_custom_call.1']
    %8 = vsyncpa [#allocation3], 0
    // Predicated region
    $region2: #{tpu_custom_call.1} parent=1 // pred_check
      _
    $region3: #{tpu_custom_call.1} parent=1 // pred_check_branch
      %10 = sbr.rel (0) target = $region5
    $region4: #{tpu_custom_call.1} parent=1 // pred_region
      _
    $region5: #{tpu_custom_call.1} parent=1 // pred_fallthru
      _
    // Predicated region
    $region6: #{tpu_custom_call.1} parent=1 // pred_check
      _
    $region7: #{tpu_custom_call.1} parent=1 // pred_check_branch
      %12 = sbr.rel (0) target = $region9
    $region8: #{tpu_custom_call.1} parent=1 // pred_region
      _
    $region9: #{tpu_custom_call.1} parent=1 // pred_fallthru
      _
    // Predicated region
    $region10: #{tpu_custom_call.1} parent=1 // pred_check
      _
    $region11: #{tpu_custom_call.1} parent=1 // pred_check_branch
      %14 = sbr.rel (0) target = $region13
    $region12: #{tpu_custom_call.1} parent=1 // pred_region
      _
    $region13: #{tpu_custom_call.1} parent=1 // pred_fallthru
      _
    %v16 = vld [vmem:[%s0] sm:$0xff]
    %v17 = vld [vmem:[%s0 + $0x8] sm:$0xff]
    %v18 = vpack.c.bf16 %v17, %v16
    %v19 = vld [vmem:[%s1] sm:$0xf]
    %v20 = vld [vmem:[%s1 + $0x4] sm:$0xf]
    %v21 = vld [vmem:[%s1 + $0x8] sm:$0xf]
    %v22 = vld [vmem:[%s1 + $0xc] sm:$0xf]
    %v23 = vld [vmem:[%s1 + $0x10] sm:$0xf]
    %v24 = vld [vmem:[%s1 + $0x14] sm:$0xf]
    %v25 = vld [vmem:[%s1 + $0x18] sm:$0xf]
    %v26 = vld [vmem:[%s1 + $0x1c] sm:$0xf]
    %v27 = vld [vmem:[%s1 + $0x20] sm:$0xf]
    %v28 = vld [vmem:[%s1 + $0x24] sm:$0xf]
    %v29 = vld [vmem:[%s1 + $0x28] sm:$0xf]
    %v30 = vld [vmem:[%s1 + $0x2c] sm:$0xf]
    %v31 = vld [vmem:[%s1 + $0x30] sm:$0xf]
    %v32 = vld [vmem:[%s1 + $0x34] sm:$0xf]
    %v33 = vld [vmem:[%s1 + $0x38] sm:$0xf]
    %v34 = vld [vmem:[%s1 + $0x3c] sm:$0xf]
    %v51 = vunpack.c.l.b16 %v19
    %v52 = vunpack.c.l.b16 %v20
    %v53 = vunpack.c.l.b16 %v21
    %v54 = vunpack.c.l.b16 %v22
    %v55 = vunpack.c.l.b16 %v23
    %v56 = vunpack.c.l.b16 %v24
    %v57 = vunpack.c.l.b16 %v25
    %v58 = vunpack.c.l.b16 %v26
    %v59 = vunpack.c.l.b16 %v27
    %v60 = vunpack.c.l.b16 %v28
    %v61 = vunpack.c.l.b16 %v29
    %v62 = vunpack.c.l.b16 %v30
    %v63 = vunpack.c.l.b16 %v31
    %v64 = vunpack.c.l.b16 %v32
    %v65 = vunpack.c.l.b16 %v33
    %v66 = vunpack.c.l.b16 %v34
    %v67 = vpack.c.b16 %v52, %v51
    %v68 = vpack.c.b16 %v54, %v53
    %v69 = vpack.c.b16 %v56, %v55
    %v70 = vpack.c.b16 %v58, %v57
    %v71 = vpack.c.b16 %v60, %v59
    %v72 = vpack.c.b16 %v62, %v61
    %v73 = vpack.c.b16 %v64, %v63
    %v74 = vpack.c.b16 %v66, %v65
    %83 = vmatprep.subr.bf16.mxu0 0
    %84 = vmatpush1.bf16.msra.mxu0 %v74
    %85 = vmatprep.subr.bf16.mxu0 0
    %86 = vmatpush1.bf16.msra.mxu0 %v73
    %87 = vmatprep.subr.bf16.mxu0 0
    %88 = vmatpush1.bf16.msra.mxu0 %v72
    %89 = vmatprep.subr.bf16.mxu0 0
    %90 = vmatpush1.bf16.msra.mxu0 %v71
    %91 = vmatprep.subr.bf16.mxu0 0
    %92 = vmatpush1.bf16.msra.mxu0 %v70
    %93 = vmatprep.subr.bf16.mxu0 0
    %94 = vmatpush1.bf16.msra.mxu0 %v69
    %95 = vmatprep.subr.bf16.mxu0 0
    %96 = vmatpush1.bf16.msra.mxu0 %v68
    %97 = vmatprep.subr.bf16.mxu0 0
    %98 = vmatpush1.bf16.msra.mxu0 %v67
    %99 = vmatprep.subr.bf16.mxu0 0
    %100 = vmatpush2.bf16.msra.mxu0 0
    %101 = vmatprep.subr.bf16.mxu0 0
    %102 = vmatpush2.bf16.msra.mxu0 0
    %103 = vmatprep.subr.bf16.mxu0 0
    %104 = vmatpush2.bf16.msra.mxu0 0
    %105 = vmatprep.subr.bf16.mxu0 0
    %106 = vmatpush2.bf16.msra.mxu0 0
    %107 = vmatprep.subr.bf16.mxu0 0
    %108 = vmatpush2.bf16.msra.mxu0 0
    %109 = vmatprep.subr.bf16.mxu0 0
    %110 = vmatpush2.bf16.msra.mxu0 0
    %111 = vmatprep.subr.bf16.mxu0 0
    %112 = vmatpush2.bf16.msra.mxu0 0
    %113 = vmatprep.subr.bf16.mxu0 0
    %114 = vmatpush2.bf16.msra.mxu0 0
    %115 = vmatprep.mubr.bf16.mxu0 0
    %116 = vmatmul.mubr.bf16.gmra.mxu0 %v18
    %v117 = vpop.f32.mrf.mxu0
    %v118 = vadd.f32 0.0, %v117
    %v119 = vpop.f32.mrf.mxu0
    %v120 = vpop.f32.mrf.mxu0
    %v121 = vadd.f32 0.0, %v120
    %v122 = vpop.f32.mrf.mxu0
    %123 = vdwg.mxu0
    %v124 = vmax.f32 %v118, 0.0
    %v125 = vmax.f32 %v121, 0.0
    %v126 = vpack.c.bf16 %v125, %v124
    %v127 = vld [vmem:[%s2] sm:$0xf]
    %v128 = vld [vmem:[%s2 + $0x4] sm:$0xf]
    %v131 = vunpack.c.l.b16 %v127
    %v132 = vunpack.c.l.b16 %v128
    %v133 = vpack.c.b16 %v132, %v131
    %vm135 = vcmask 130048
    %v137 = vsel %vm135, %v126, 0
    %139 = vmatprep.subr.bf16.mxu0 0
    %140 = vmatpush1.bf16.msra.mxu0 0
    %141 = vmatprep.subr.bf16.mxu0 0
    %142 = vmatpush1.bf16.msra.mxu0 0
    %143 = vmatprep.subr.bf16.mxu0 0
    %144 = vmatpush1.bf16.msra.mxu0 0
    %145 = vmatprep.subr.bf16.mxu0 0
    %146 = vmatpush1.bf16.msra.mxu0 0
    %147 = vmatprep.subr.bf16.mxu0 0
    %148 = vmatpush1.bf16.msra.mxu0 0
    %149 = vmatprep.subr.bf16.mxu0 0
    %150 = vmatpush1.bf16.msra.mxu0 0
    %151 = vmatprep.subr.bf16.mxu0 0
    %152 = vmatpush1.bf16.msra.mxu0 0
    %153 = vmatprep.subr.bf16.mxu0 0
    %154 = vmatpush1.bf16.msra.mxu0 %v133
    %155 = vmatprep.subr.bf16.mxu0 0
    %156 = vmatpush2.bf16.msra.mxu0 0
    %157 = vmatprep.subr.bf16.mxu0 0
    %158 = vmatpush2.bf16.msra.mxu0 0
    %159 = vmatprep.subr.bf16.mxu0 0
    %160 = vmatpush2.bf16.msra.mxu0 0
    %161 = vmatprep.subr.bf16.mxu0 0
    %162 = vmatpush2.bf16.msra.mxu0 0
    %163 = vmatprep.subr.bf16.mxu0 0
    %164 = vmatpush2.bf16.msra.mxu0 0
    %165 = vmatprep.subr.bf16.mxu0 0
    %166 = vmatpush2.bf16.msra.mxu0 0
    %167 = vmatprep.subr.bf16.mxu0 0
    %168 = vmatpush2.bf16.msra.mxu0 0
    %169 = vmatprep.subr.bf16.mxu0 0
    %170 = vmatpush2.bf16.msra.mxu0 0
    %171 = vmatprep.mubr.bf16.mxu0 0
    %172 = vmatmul.mubr.bf16.gmra.mxu0 %v137
    %v173 = vpop.f32.mrf.mxu0
    %v174 = vadd.f32 %v16, %v173
    %v175 = vpop.f32.mrf.mxu0
    %v176 = vpop.f32.mrf.mxu0
    %v177 = vadd.f32 %v17, %v176
    %v178 = vpop.f32.mrf.mxu0
    %179 = vdwg.mxu0
    %180 = vst [vmem:[#allocation2] sm:$0xff] %v174
    %181 = vst [vmem:[#allocation2 + $0x8] sm:$0xff] %v177
    // Predicated region
    $region14: #{tpu_custom_call.1} parent=1 // pred_check
      _
    $region15: #{tpu_custom_call.1} parent=1 // pred_check_branch
      %183 = sbr.rel (0) target = $region17
    $region16: #{tpu_custom_call.1} parent=1 // pred_region
      %s185 = ssub.s32 256, 256
      %186 = vsyncadd [#allocation3], %s185
      %s187 = sshll.u32 [#allocation2], 4
      %s188 = int_to_ptr.vmem [resolvable:$true] %s187
      %193 = dma.vmem_to_hbm [thread:$0]  %s188, 256, %s3, [#allocation3], 128, 128, 8
    $region17: #{tpu_custom_call.1} parent=1 // pred_fallthru
      _
    // Predicated region
    $region18: #{tpu_custom_call.1} parent=1 // pred_check
      _
    $region19: #{tpu_custom_call.1} parent=1 // pred_check_branch
      %195 = sbr.rel (0) target = $region21
    $region20: #{tpu_custom_call.1} parent=1 // pred_region
      %196 = dma.done [#allocation3], 256
    $region21: #{tpu_custom_call.1} parent=1 // pred_fallthru
      _
    %197 = vsyncpa [#allocation3], 1

</llo_original>
